<compile_context>
chip_gen: v5e
topology: v5e:2x2
jax: 0.10.0
libtpu: 0.0.40
codegen_flags: <defaults>
</compile_context>

<pallas_src>
import functools

import jax
import jax.numpy as jnp
from jax import lax
from jax.experimental import pallas as pl
from jax.experimental.pallas import tpu as pltpu


# ----------------------------------------------------------------------------
# tiling / VMEM helpers
# ----------------------------------------------------------------------------
@functools.lru_cache(maxsize=None)
def _conv_vmem_limit() -> int:
    # Explicit scoped-VMEM limit (v5e default is only 16 MiB; v7x has 64 MiB
    # physical per TensorCore).  Our blocks stay under ~6 MiB, so cap//2 is
    # safe on every generation.
    try:
        cap = int(pltpu.get_tpu_info().vmem_capacity_bytes)
    except Exception:
        cap = 64 * 1024 * 1024
    return int(min(cap // 2, 40 * 1024 * 1024))


def _choose_cout_tile(cout: int) -> int:
    """Cout >= 256: split columns 2-way so v7x megacore shards disjoint weight
    columns (no duplicated weight DMA).  Smaller Cout: one full block."""
    if cout >= 256:
        return cout // 2
    return cout


def _choose_row_tile(rows: int, width: int, three_c: int, cout: int) -> int:
    """Image-row tile (the M block covers tr*width output pixels).

    Weight-bound layers (deep convs): a single full-M block so every weight
    column block is DMA'd exactly once.  Activation-bound layers (early,
    large-spatial convs): split rows into >=2 blocks for megacore, keeping the
    A block around <=512 KiB and the M block a multiple of 16 rows (bf16)."""
    a_bytes = rows * width * three_c * 2
    w_bytes = 3 * three_c * cout * 2
    if w_bytes >= a_bytes or rows <= 8:
        return rows
    budget = 512 * 1024
    for tr in range(rows - 1, 0, -1):
        if rows % tr:
            continue
        if (tr * width) % 16:
            continue
        if tr * width * three_c * 2 <= budget:
            return tr
    return rows


# ----------------------------------------------------------------------------
# plain-JAX glue (fuses under jit)
# ----------------------------------------------------------------------------
def _rowtaps_3x3(x):
    """x: [N, H, W, C] -> bf16 A of shape [N*H*W, 3*C].

    Only the 3 dy (row) taps are materialized in HBM (3x the input bytes vs 9x
    for full im2col); the dx (column) shifts are generated inside the kernel."""
    n, h, w, c = x.shape
    xp = jnp.pad(x.astype(jnp.bfloat16), ((0, 0), (1, 1), (0, 0), (0, 0)))
    taps = [xp[:, dy:dy + h, :, :] for dy in range(3)]          # dy = -1, 0, +1
    return jnp.concatenate(taps, axis=-1).reshape(n * h * w, 3 * c)


def _pack_weight(w_oihw):
    """torch conv weight [Cout, Cin, 3, 3] -> bf16 [3 (kx), 3*Cin, Cout] with
    row order (ky, cin) matching the dy-tap concat order of _rowtaps_3x3."""
    cout, cin = w_oihw.shape[0], w_oihw.shape[1]
    w = jnp.transpose(w_oihw, (3, 2, 1, 0))                    # [kx, ky, cin, cout]
    return w.reshape(3, 3 * cin, cout).astype(jnp.bfloat16)


def _maxpool2x2(x):
    n, h, w, c = x.shape
    return jnp.max(x.reshape(n, h // 2, 2, w // 2, 2, c), axis=(2, 4))


# ----------------------------------------------------------------------------
# Pallas conv kernel
# ----------------------------------------------------------------------------
def _conv3x3_kernel(a_ref, b_ref, bias_ref, o_ref, *, width, relu_out):
    """3x3/pad=1 conv block: three bf16 MXU matmuls (one per kx tap) on the
    dy-row-tap matrix.  The kx = +-1 contributions are the f32 partial
    products rolled by one output row (pltpu.roll, XLU) with image-column
    border masks.  Bias add, optional ReLU and bf16 store in one f32 epilogue
    (no VMEM accumulator / pl.when needed: K is not grid-tiled)."""
    tm = o_ref.shape[0]
    a = a_ref[...]                                              # (tm, 3*Cin) bf16
    # One matmul per kx tap (same total FLOPs as a 9*Cin im2col matmul).
    p_l = jnp.dot(a, b_ref[0], preferred_element_type=jnp.float32)   # kx = -1
    p_c = jnp.dot(a, b_ref[1], preferred_element_type=jnp.float32)   # kx =  0
    p_r = jnp.dot(a, b_ref[2], preferred_element_type=jnp.float32)   # kx = +1
    # Column position of each output row within its image row (blocks cover
    # whole image rows, so this pattern is identical for every block).
    wpos = lax.broadcasted_iota(jnp.int32, (tm, 1), 0) % width
    # out[m] = bias + p_c[m] + p_l[m-1] (unless w==0) + p_r[m+1] (unless w==W-1)
    acc = p_c + bias_ref[...]
    acc = acc + jnp.where(wpos == 0, 0.0, pltpu.roll(p_l, shift=1, axis=0))
    acc = acc + jnp.where(wpos == width - 1, 0.0,
                          pltpu.roll(p_r, shift=tm - 1, axis=0))
    if relu_out:
        acc = jnp.maximum(acc, 0.0)
    o_ref[...] = acc.astype(o_ref.dtype)


def conv3x3(x, w_packed, bias_row, *, relu_out=True):
    """x: [N, H, W, Cin]; w_packed: bf16 [3, 3*Cin, Cout]; bias_row: f32 [1, Cout].
    Returns bf16 [N, H, W, Cout]."""
    n, h, w, cin = x.shape
    three_c = 3 * cin
    cout = w_packed.shape[-1]
    a = _rowtaps_3x3(x)                                          # bf16 [M, 3*Cin]
    rows = n * h
    tr = _choose_row_tile(rows, w, three_c, cout)
    tm = tr * w
    tn = _choose_cout_tile(cout)
    m = rows * w
    out = pl.pallas_call(
        functools.partial(_conv3x3_kernel, width=w, relu_out=relu_out),
        out_shape=jax.ShapeDtypeStruct((m, cout), jnp.bfloat16),
        grid_spec=pltpu.PrefetchScalarGridSpec(
            num_scalar_prefetch=0,
            grid=(rows // tr, cout // tn),
            in_specs=[
                pl.BlockSpec((tm, three_c), lambda i, j: (i, 0)),
                pl.BlockSpec((3, three_c, tn), lambda i, j: (0, 0, j)),
                pl.BlockSpec((1, tn), lambda i, j: (0, j)),
            ],
            out_specs=pl.BlockSpec((tm, tn), lambda i, j: (i, j)),
        ),
        compiler_params=pltpu.CompilerParams(
            dimension_semantics=("parallel", "parallel"),
            vmem_limit_bytes=_conv_vmem_limit()),
    )(a, w_packed, bias_row)
    return out.reshape(n, h, w, cout)


# ----------------------------------------------------------------------------
# VGG19 (torchvision vgg19.features indices 0..30, slice1..slice4 boundaries)
# ----------------------------------------------------------------------------
_CONV_CHANNELS = [
    (3, 64), (64, 64),                     # slice1: features 0,2
    (64, 128), (128, 128),                 #         features 5,7
    (128, 256), (256, 256),                # slice2: features 10,12 (h_relu2 raw)
    (256, 256), (256, 256),                # slice3: features 14,16
    (256, 512), (512, 512),                #         features 19,21 (h_relu3 raw)
    (512, 512), (512, 512),                # slice4: features 23,25
    (512, 512), (512, 512),                #         features 28,30 (h_relu4 raw)
]


def init_vgg19_params(key):
    """Deterministic synthetic He-init weights in the kernel's packed layout.
    # TODO(synk): load real torchvision-pretrained VGG19 weights (no
    # file/network access available in-script)."""
    params = []
    keys = jax.random.split(key, 2 * len(_CONV_CHANNELS))
    for idx, (cin, cout) in enumerate(_CONV_CHANNELS):
        kw_, kb_ = keys[2 * idx], keys[2 * idx + 1]
        std = (2.0 / (9.0 * cin)) ** 0.5
        w = jax.random.normal(kw_, (cout, cin, 3, 3), jnp.float32) * std   # OIHW
        b = jax.random.normal(kb_, (cout,), jnp.float32) * 0.01
        params.append((_pack_weight(w), b.reshape(1, cout).astype(jnp.float32)))
    return params


def vgg19_forward(params, x_nchw):
    """Matches Vgg19.forward: X (NCHW) -> (h_relu3, h_relu4), NCHW float32."""
    p = params
    x = jnp.transpose(x_nchw, (0, 2, 3, 1)).astype(jnp.float32)   # NCHW -> NHWC
    # slice1: conv-relu, conv-relu, pool, conv-relu, conv-relu      (features 0..8)
    x = conv3x3(x, *p[0]); x = conv3x3(x, *p[1]); x = _maxpool2x2(x)
    x = conv3x3(x, *p[2]); x = conv3x3(x, *p[3])
    # slice2: pool, conv-relu, conv (no relu)                       (features 9..12)
    x = _maxpool2x2(x)
    x = conv3x3(x, *p[4]); x = conv3x3(x, *p[5], relu_out=False)
    # slice3: relu, conv-relu, conv-relu, pool, conv-relu, conv     (features 13..21)
    x = jnp.maximum(x, 0)
    x = conv3x3(x, *p[6]); x = conv3x3(x, *p[7]); x = _maxpool2x2(x)
    x = conv3x3(x, *p[8]); h_relu3 = conv3x3(x, *p[9], relu_out=False)
    # slice4: relu, conv-relu, conv-relu, pool, conv-relu, conv     (ReLU + 23..30)
    x = jnp.maximum(h_relu3, 0)
    x = conv3x3(x, *p[10]); x = conv3x3(x, *p[11]); x = _maxpool2x2(x)
    x = conv3x3(x, *p[12]); h_relu4 = conv3x3(x, *p[13], relu_out=False)
    to_nchw = lambda t: jnp.transpose(t.astype(jnp.float32), (0, 3, 1, 2))
    return to_nchw(h_relu3), to_nchw(h_relu4)


# ----------------------------------------------------------------------------
# numerical self-check of the conv kernel against lax.conv (f32 reference)
# ----------------------------------------------------------------------------
def _conv3x3_ref(x_nhwc, w_oihw, bias):
    w_hwio = jnp.transpose(w_oihw, (2, 3, 1, 0))
    y = lax.conv_general_dilated(x_nhwc, w_hwio, (1, 1), "SAME",
                                 dimension_numbers=("NHWC", "HWIO", "NHWC"))
    return y + bias.reshape(1, 1, 1, -1)


def _self_check():
    for case, (n, hw, cin, cout) in enumerate(((1, 8, 3, 64), (1, 4, 128, 256))):
        k1, k2, k3 = jax.random.split(jax.random.PRNGKey(100 + case), 3)
        x = jax.random.uniform(k1, (n, hw, hw, cin), jnp.float32)
        x = x.astype(jnp.bfloat16).astype(jnp.float32)
        w = jax.random.normal(k2, (cout, cin, 3, 3), jnp.float32) * (2.0 / (9.0 * cin)) ** 0.5
        w = w.astype(jnp.bfloat16).astype(jnp.float32)
        b = jax.random.normal(k3, (cout,), jnp.float32) * 0.01
        got = conv3x3(x, _pack_weight(w), b.reshape(1, cout), relu_out=False)
        want = _conv3x3_ref(x, w, b)
        err = float(jnp.max(jnp.abs(got.astype(jnp.float32) - want)))
        assert err < 5e-2, f"conv3x3 self-check {case} failed (max abs err {err})"


# ----------------------------------------------------------------------------
# demo
# ----------------------------------------------------------------------------
if __name__ == "__main__":
    _self_check()

    key = jax.random.PRNGKey(0)
    kx, kw = jax.random.split(key)
    N, C, H, W = 2, 3, 32, 32                      # PyTorch-style NCHW input
    x = jax.random.uniform(kx, (N, C, H, W), jnp.float32)

    params = init_vgg19_params(kw)
    fwd = jax.jit(vgg19_forward)
    h_relu3, h_relu4 = fwd(params, x)
    jax.block_until_ready((h_relu3, h_relu4))
    assert h_relu3.shape == (N, 512, H // 8, W // 8)
    assert h_relu4.shape == (N, 512, H // 16, W // 16)
    print("KERNEL_OK")
</pallas_src>

<mosaic_0001>
module attributes {stable_mosaic.version = 11 : i64} {
  func.func @_conv3x3_kernel(%arg0: i32, %arg1: i32, %arg2: memref<64x9xbf16, #tpu.memory_space<vmem>>, %arg3: memref<3x9x64xbf16, #tpu.memory_space<vmem>>, %arg4: memref<1x64xf32, #tpu.memory_space<vmem>>, %arg5: memref<64x64xbf16, #tpu.memory_space<vmem>>) attributes {dimension_semantics = [#tpu.dimension_semantics<parallel>, #tpu.dimension_semantics<parallel>], iteration_bounds = array<i64: 1, 1>, scalar_prefetch = 0 : i64, scratch_operands = 0 : i64, tpu.core_type = #tpu.core_type<tc>, window_params = [{transform_indices = @transform_0, window_bounds = array<i64: 64, 9>}, {transform_indices = @transform_1, window_bounds = array<i64: 3, 9, 64>}, {transform_indices = @transform_2, window_bounds = array<i64: 1, 64>}, {transform_indices = @transform_3, window_bounds = array<i64: 64, 64>}]} {
    %c0 = arith.constant 0 : index
    %c0_0 = arith.constant 0 : index
    %0 = vector.load %arg2[%c0, %c0_0] : memref<64x9xbf16, #tpu.memory_space<vmem>>, vector<64x9xbf16>
    %c0_1 = arith.constant 0 : index
    %c0_2 = arith.constant 0 : index
    %c0_3 = arith.constant 0 : index
    %1 = vector.load %arg3[%c0_1, %c0_2, %c0_3] : memref<3x9x64xbf16, #tpu.memory_space<vmem>>, vector<1x9x64xbf16>
    %2 = vector.shape_cast %1 : vector<1x9x64xbf16> to vector<9x64xbf16>
    %cst = arith.constant dense<0.000000e+00> : vector<64x64xf32>
    %3 = tpu.matmul %0, %2, %cst {dimension_numbers = #tpu.dot_dimension_numbers<[1], [0], [0], [1], [0, 0, 1, 1], [], []>} : vector<64x9xbf16>, vector<9x64xbf16>, vector<64x64xf32> -> vector<64x64xf32>
    %c1 = arith.constant 1 : index
    %c0_4 = arith.constant 0 : index
    %c0_5 = arith.constant 0 : index
    %4 = vector.load %arg3[%c1, %c0_4, %c0_5] : memref<3x9x64xbf16, #tpu.memory_space<vmem>>, vector<1x9x64xbf16>
    %5 = vector.shape_cast %4 : vector<1x9x64xbf16> to vector<9x64xbf16>
    %cst_6 = arith.constant dense<0.000000e+00> : vector<64x64xf32>
    %6 = tpu.matmul %0, %5, %cst_6 {dimension_numbers = #tpu.dot_dimension_numbers<[1], [0], [0], [1], [0, 0, 1, 1], [], []>} : vector<64x9xbf16>, vector<9x64xbf16>, vector<64x64xf32> -> vector<64x64xf32>
    %c2 = arith.constant 2 : index
    %c0_7 = arith.constant 0 : index
    %c0_8 = arith.constant 0 : index
    %7 = vector.load %arg3[%c2, %c0_7, %c0_8] : memref<3x9x64xbf16, #tpu.memory_space<vmem>>, vector<1x9x64xbf16>
    %8 = vector.shape_cast %7 : vector<1x9x64xbf16> to vector<9x64xbf16>
    %cst_9 = arith.constant dense<0.000000e+00> : vector<64x64xf32>
    %9 = tpu.matmul %0, %8, %cst_9 {dimension_numbers = #tpu.dot_dimension_numbers<[1], [0], [0], [1], [0, 0, 1, 1], [], []>} : vector<64x9xbf16>, vector<9x64xbf16>, vector<64x64xf32> -> vector<64x64xf32>
    %10 = tpu.iota {dimensions = array<i32: 0>} : vector<64x1xi32>
    %c8_i32 = arith.constant 8 : i32
    %c0_i32 = arith.constant 0 : i32
    %11 = arith.cmpi eq, %c8_i32, %c0_i32 : i32
    %c1_i32 = arith.constant 1 : i32
    %12 = arith.select %11, %c1_i32, %c8_i32 : i32
    %13 = vector.broadcast %12 : i32 to vector<64x1xi32>
    %14 = arith.remsi %10, %13 : vector<64x1xi32>
    %c0_i32_10 = arith.constant 0 : i32
    %15 = vector.broadcast %c0_i32_10 : i32 to vector<64x1xi32>
    %16 = arith.cmpi ne, %14, %15 : vector<64x1xi32>
    %c0_i32_11 = arith.constant 0 : i32
    %17 = vector.broadcast %c0_i32_11 : i32 to vector<64x1xi32>
    %18 = arith.cmpi slt, %14, %17 : vector<64x1xi32>
    %c0_i32_12 = arith.constant 0 : i32
    %19 = arith.cmpi slt, %12, %c0_i32_12 : i32
    %20 = vector.broadcast %19 : i1 to vector<64x1xi1>
    %21 = vector.broadcast %20 : vector<64x1xi1> to vector<64x1xi1>
    %22 = arith.xori %18, %21 : vector<64x1xi1>
    %23 = arith.andi %22, %16 : vector<64x1xi1>
    %24 = vector.broadcast %12 : i32 to vector<64x1xi32>
    %25 = arith.addi %14, %24 : vector<64x1xi32>
    %26 = arith.select %23, %25, %14 : vector<64x1xi1>, vector<64x1xi32>
    %c0_13 = arith.constant 0 : index
    %c0_14 = arith.constant 0 : index
    %27 = vector.load %arg4[%c0_13, %c0_14] : memref<1x64xf32, #tpu.memory_space<vmem>>, vector<1x64xf32>
    %28 = vector.broadcast %27 : vector<1x64xf32> to vector<64x64xf32>
    %29 = arith.addf %6, %28 : vector<64x64xf32>
    %c0_i32_15 = arith.constant 0 : i32
    %30 = vector.broadcast %c0_i32_15 : i32 to vector<64x1xi32>
    %31 = arith.cmpi eq, %26, %30 : vector<64x1xi32>
    %c1_i32_16 = arith.constant 1 : i32
    %32 = tpu.dynamic_rotate %3 by %c1_i32_16 dim 0 : vector<64x64xf32>, i32 -> vector<64x64xf32>
    %cst_17 = arith.constant 0.000000e+00 : f32
    %33 = vector.shape_cast %31 : vector<64x1xi1> to vector<64x1xi1>
    %34 = vector.broadcast %33 : vector<64x1xi1> to vector<64x64xi1>
    %35 = vector.broadcast %cst_17 : f32 to vector<64x64xf32>
    %36 = arith.select %34, %35, %32 : vector<64x64xi1>, vector<64x64xf32>
    %37 = arith.addf %29, %36 : vector<64x64xf32>
    %c7_i32 = arith.constant 7 : i32
    %38 = vector.broadcast %c7_i32 : i32 to vector<64x1xi32>
    %39 = arith.cmpi eq, %26, %38 : vector<64x1xi32>
    %c63_i32 = arith.constant 63 : i32
    %40 = tpu.dynamic_rotate %9 by %c63_i32 dim 0 : vector<64x64xf32>, i32 -> vector<64x64xf32>
    %cst_18 = arith.constant 0.000000e+00 : f32
    %41 = vector.shape_cast %39 : vector<64x1xi1> to vector<64x1xi1>
    %42 = vector.broadcast %41 : vector<64x1xi1> to vector<64x64xi1>
    %43 = vector.broadcast %cst_18 : f32 to vector<64x64xf32>
    %44 = arith.select %42, %43, %40 : vector<64x64xi1>, vector<64x64xf32>
    %45 = arith.addf %37, %44 : vector<64x64xf32>
    %46 = arith.truncf %45 : vector<64x64xf32> to vector<64x64xbf16>
    %c0_19 = arith.constant 0 : index
    %c0_20 = arith.constant 0 : index
    %47 = vector.load %arg5[%c0_19, %c0_20] : memref<64x64xbf16, #tpu.memory_space<vmem>>, vector<64x64xbf16>
    tpu.vector_store %arg5[%c0_19, %c0_20], %46 {strides = array<i32>} : memref<64x64xbf16, #tpu.memory_space<vmem>>, vector<64x64xbf16>,
    return
  }
  func.func @transform_0(%arg0: i32, %arg1: i32) -> (i32, i32) {
    %c0_i32 = arith.constant 0 : i32
    %c0_i32_0 = arith.constant 0 : i32
    return %arg0, %c0_i32 : i32, i32
  }
  func.func @transform_1(%arg0: i32, %arg1: i32) -> (i32, i32, i32) {
    %c0_i32 = arith.constant 0 : i32
    %c0_i32_0 = arith.constant 0 : i32
    %c0_i32_1 = arith.constant 0 : i32
    return %c0_i32, %c0_i32_0, %arg1 : i32, i32, i32
  }
  func.func @transform_2(%arg0: i32, %arg1: i32) -> (i32, i32) {
    %c0_i32 = arith.constant 0 : i32
    %c0_i32_0 = arith.constant 0 : i32
    return %c0_i32, %arg1 : i32, i32
  }
  func.func @transform_3(%arg0: i32, %arg1: i32) -> (i32, i32) {
    %c0_i32 = arith.constant 0 : i32
    return %arg0, %arg1 : i32, i32
  }
}

</mosaic_0001>

<llo_original>
// kernel: tpu_custom_call.1
$region0: #{tpu_custom_call.1}
  #allocation0 [shape = 'u32[]', space=smem, size = 0x4, offset = 0x4, fixed_abs, tag = 'smem constant byte address 0x4 - core index']
  #allocation1 [shape = 'u32[72,128]{1,0:T(1,128)}', space=vmem, size = 0x9000, scoped, tag = 'internal scratch']
  %s0 = inlined_call_operand.vmem [shape: bf16[64,9], index: 0, kind: input, shape index: {}]
  %s1 = inlined_call_operand.vmem [shape: bf16[3,9,64], index: 1, kind: input, shape index: {}]
  %s2 = inlined_call_operand.vmem [shape: f32[1,64], index: 2, kind: input, shape index: {}]
  %s3 = inlined_call_operand.hbm [shape: bf16[64,64], index: 3, kind: output, shape index: {}]
  %s4 = sld [smem:[#allocation0]]
  $region22: #{tpu_custom_call.1} parent=0
    _
  %s6 = ssub.s32 1, %s4
  %s7 = scalar_select 0, %s6, %s4
  $region1: #{tpu_custom_call.1} parent=0
    #allocation2 [shape = 'u8[16384]{0}', space=vmem, size = 0x4000, scoped, tag = 'output window, operand 0, single buffered']
    #allocation3 [shape = 's32[1]{0}', space=sflag, size = 0x4, scoped, tag = 'scoped memory for tpu_custom_call.1']
    %8 = vsyncpa [#allocation3], 0
    // Predicated region
    $region2: #{tpu_custom_call.1} parent=1 // pred_check
      _
    $region3: #{tpu_custom_call.1} parent=1 // pred_check_branch
      %10 = sbr.rel (0) target = $region5
    $region4: #{tpu_custom_call.1} parent=1 // pred_region
      _
    $region5: #{tpu_custom_call.1} parent=1 // pred_fallthru
      _
    // Predicated region
    $region6: #{tpu_custom_call.1} parent=1 // pred_check
      _
    $region7: #{tpu_custom_call.1} parent=1 // pred_check_branch
      %12 = sbr.rel (0) target = $region9
    $region8: #{tpu_custom_call.1} parent=1 // pred_region
      _
    $region9: #{tpu_custom_call.1} parent=1 // pred_fallthru
      _
    // Predicated region
    $region10: #{tpu_custom_call.1} parent=1 // pred_check
      _
    $region11: #{tpu_custom_call.1} parent=1 // pred_check_branch
      %14 = sbr.rel (0) target = $region13
    $region12: #{tpu_custom_call.1} parent=1 // pred_region
      _
    $region13: #{tpu_custom_call.1} parent=1 // pred_fallthru
      _
    %v16 = vld [vmem:[%s0] sm:$0xf]
    %v17 = vld [vmem:[%s0 + $0x4] sm:$0xf]
    %v18 = vld [vmem:[%s0 + $0x8] sm:$0xf]
    %v19 = vld [vmem:[%s0 + $0xc] sm:$0xf]
    %v20 = vld [vmem:[%s0 + $0x10] sm:$0xf]
    %v21 = vld [vmem:[%s0 + $0x14] sm:$0xf]
    %v22 = vld [vmem:[%s0 + $0x18] sm:$0xf]
    %v23 = vld [vmem:[%s0 + $0x1c] sm:$0xf]
    %v24 = vld [vmem:[%s1] sm:$0xf]
    %v25 = vld [vmem:[%s1 + $0x4] sm:$0x1]
    %v34 = vunpack.c.l.b16 %v16
    %v35 = vunpack.c.l.b16 %v17
    %v36 = vunpack.c.l.b16 %v18
    %v37 = vunpack.c.l.b16 %v19
    %v38 = vunpack.c.l.b16 %v20
    %v39 = vunpack.c.l.b16 %v21
    %v40 = vunpack.c.l.b16 %v22
    %v41 = vunpack.c.l.b16 %v23
    %v42 = vpack.c.b16 %v35, %v34
    %v43 = vpack.c.b16 %v37, %v36
    %v44 = vpack.c.b16 %v39, %v38
    %v45 = vpack.c.b16 %v41, %v40
    %v48 = vunpack.c.l.b16 %v24
    %v49 = vunpack.c.l.b16 %v25
    %v50 = vpack.c.b16 %v49, %v48
    %vm51 = vcmask 72704
    %v53 = vsel %vm51, %v42, 0
    %v56 = vsel %vm51, %v43, 0
    %v59 = vsel %vm51, %v44, 0
    %v62 = vsel %vm51, %v45, 0
    %vm64 = vcmask 1043456
    %vm65 = vcmask 1044480
    %v66 = vsel %vm64, 4294967295, 65535
    %v67 = vsel %vm65, %v66, 0
    %v69 = vand.u32 %v50, %v67
    %71 = vmatpush.bf16.msra.mxu0 0
    %72 = vmatpush.bf16.msra.mxu0 0
    %73 = vmatpush.bf16.msra.mxu0 0
    %74 = vmatpush.bf16.msra.mxu0 0
    %75 = vmatpush.bf16.msra.mxu0 0
    %76 = vmatpush.bf16.msra.mxu0 0
    %77 = vmatpush.bf16.msra.mxu0 0
    %78 = vmatpush.bf16.msra.mxu0 %v69
    %79 = vmatmul.bf16.gmra.mxu0 %v53
    %v80 = vpop.f32.mrf.mxu0
    %v81 = vadd.f32 0.0, %v80
    %v82 = vpop.f32.mrf.mxu0
    %v83 = vadd.f32 0.0, %v82
    %84 = vmatmul.bf16.gmra.mxu0 %v56
    %v85 = vpop.f32.mrf.mxu0
    %v86 = vadd.f32 0.0, %v85
    %v87 = vpop.f32.mrf.mxu0
    %v88 = vadd.f32 0.0, %v87
    %89 = vmatmul.bf16.gmra.mxu0 %v59
    %v90 = vpop.f32.mrf.mxu0
    %v91 = vadd.f32 0.0, %v90
    %v92 = vpop.f32.mrf.mxu0
    %v93 = vadd.f32 0.0, %v92
    %94 = vmatmul.bf16.gmra.mxu0 %v62
    %v95 = vpop.f32.mrf.mxu0
    %v96 = vadd.f32 0.0, %v95
    %v97 = vpop.f32.mrf.mxu0
    %v98 = vadd.f32 0.0, %v97
    %99 = vdwg.mxu0
    %s100 = scalar_lea.vmem %s1, 8
    %v101 = vld [vmem:[%s100] sm:$0xf]
    %v102 = vld [vmem:[%s100 + $0x4] sm:$0x1]
    %s103 = scalar_lea.vmem %s1, 16
    %v104 = vld [vmem:[%s103] sm:$0xf]
    %v105 = vld [vmem:[%s103 + $0x4] sm:$0x1]
    %v108 = vunpack.c.l.b16 %v104
    %v109 = vunpack.c.l.b16 %v105
    %v110 = vpack.c.b16 %v109, %v108
    %v112 = vand.u32 %v110, %v67
    %114 = vmatpush.bf16.msra.mxu0 0
    %115 = vmatpush.bf16.msra.mxu0 0
    %116 = vmatpush.bf16.msra.mxu0 0
    %117 = vmatpush.bf16.msra.mxu0 0
    %118 = vmatpush.bf16.msra.mxu0 0
    %119 = vmatpush.bf16.msra.mxu0 0
    %120 = vmatpush.bf16.msra.mxu0 0
    %121 = vmatpush.bf16.msra.mxu0 %v112
    %122 = vmatmul.bf16.gmra.mxu0 %v53
    %v123 = vpop.f32.mrf.mxu0
    %v124 = vadd.f32 0.0, %v123
    %v125 = vpop.f32.mrf.mxu0
    %v126 = vadd.f32 0.0, %v125
    %127 = vmatmul.bf16.gmra.mxu0 %v56
    %v128 = vpop.f32.mrf.mxu0
    %v129 = vadd.f32 0.0, %v128
    %v130 = vpop.f32.mrf.mxu0
    %v131 = vadd.f32 0.0, %v130
    %132 = vmatmul.bf16.gmra.mxu0 %v59
    %v133 = vpop.f32.mrf.mxu0
    %v134 = vadd.f32 0.0, %v133
    %v135 = vpop.f32.mrf.mxu0
    %v136 = vadd.f32 0.0, %v135
    %137 = vmatmul.bf16.gmra.mxu0 %v62
    %v138 = vpop.f32.mrf.mxu0
    %v139 = vadd.f32 0.0, %v138
    %v140 = vpop.f32.mrf.mxu0
    %v141 = vadd.f32 0.0, %v140
    %142 = vdwg.mxu0
    %v143 = vlaneseq
    %v144 = vshrl.u32 %v143, 7
    %v145 = vadd.s32 %v144, 8
    %v146 = vadd.s32 %v144, 16
    %v147 = vadd.s32 %v144, 24
    %v148 = vadd.s32 %v144, 32
    %v149 = vadd.s32 %v144, 40
    %v150 = vadd.s32 %v144, 48
    %v151 = vadd.s32 %v144, 56
    %vm152 = vcmp.lt.s32.totalorder %v144, 0
    %v153 = vsub.s32 0, %v144
    %v154 = vsel %vm152, %v153, %v144
    %v155 = vshrl.u32 %v154, 3
    %v156 = vand.u32 %v154, 7
    %v157 = vsub.s32 0, %v156
    %v158 = vsel %vm152, %v157, %v156
    %vm159 = vcmp.lt.s32.totalorder %v145, 0
    %v160 = vsub.s32 0, %v145
    %v161 = vsel %vm159, %v160, %v145
    %v162 = vshrl.u32 %v161, 3
    %v163 = vand.u32 %v161, 7
    %v164 = vsub.s32 0, %v163
    %v165 = vsel %vm159, %v164, %v163
    %vm166 = vcmp.lt.s32.totalorder %v146, 0
    %v167 = vsub.s32 0, %v146
    %v168 = vsel %vm166, %v167, %v146
    %v169 = vshrl.u32 %v168, 3
    %v170 = vand.u32 %v168, 7
    %v171 = vsub.s32 0, %v170
    %v172 = vsel %vm166, %v171, %v170
    %vm173 = vcmp.lt.s32.totalorder %v147, 0
    %v174 = vsub.s32 0, %v147
    %v175 = vsel %vm173, %v174, %v147
    %v176 = vshrl.u32 %v175, 3
    %v177 = vand.u32 %v175, 7
    %v178 = vsub.s32 0, %v177
    %v179 = vsel %vm173, %v178, %v177
    %vm180 = vcmp.lt.s32.totalorder %v148, 0
    %v181 = vsub.s32 0, %v148
    %v182 = vsel %vm180, %v181, %v148
    %v183 = vshrl.u32 %v182, 3
    %v184 = vand.u32 %v182, 7
    %v185 = vsub.s32 0, %v184
    %v186 = vsel %vm180, %v185, %v184
    %vm187 = vcmp.lt.s32.totalorder %v149, 0
    %v188 = vsub.s32 0, %v149
    %v189 = vsel %vm187, %v188, %v149
    %v190 = vshrl.u32 %v189, 3
    %v191 = vand.u32 %v189, 7
    %v192 = vsub.s32 0, %v191
    %v193 = vsel %vm187, %v192, %v191
    %vm194 = vcmp.lt.s32.totalorder %v150, 0
    %v195 = vsub.s32 0, %v150
    %v196 = vsel %vm194, %v195, %v150
    %v197 = vshrl.u32 %v196, 3
    %v198 = vand.u32 %v196, 7
    %v199 = vsub.s32 0, %v198
    %v200 = vsel %vm194, %v199, %v198
    %vm201 = vcmp.lt.s32.totalorder %v151, 0
    %v202 = vsub.s32 0, %v151
    %v203 = vsel %vm201, %v202, %v151
    %v204 = vshrl.u32 %v203, 3
    %v205 = vand.u32 %v203, 7
    %v206 = vsub.s32 0, %v205
    %v207 = vsel %vm201, %v206, %v205
    %vm208 = vcmp.ne.s32.totalorder %v158, 0
    %vm209 = vcmp.ne.s32.totalorder %v165, 0
    %vm210 = vcmp.ne.s32.totalorder %v172, 0
    %vm211 = vcmp.ne.s32.totalorder %v179, 0
    %vm212 = vcmp.ne.s32.totalorder %v186, 0
    %vm213 = vcmp.ne.s32.totalorder %v193, 0
    %vm214 = vcmp.ne.s32.totalorder %v200, 0
    %vm215 = vcmp.ne.s32.totalorder %v207, 0
    %vm216 = vcmp.lt.s32.totalorder %v158, 0
    %vm217 = vcmp.lt.s32.totalorder %v165, 0
    %vm218 = vcmp.lt.s32.totalorder %v172, 0
    %vm219 = vcmp.lt.s32.totalorder %v179, 0
    %vm220 = vcmp.lt.s32.totalorder %v186, 0
    %vm221 = vcmp.lt.s32.totalorder %v193, 0
    %vm222 = vcmp.lt.s32.totalorder %v200, 0
    %vm223 = vcmp.lt.s32.totalorder %v207, 0
    %vm224 = vmand %vm216, %vm208
    %vm225 = vmand %vm217, %vm209
    %vm226 = vmand %vm218, %vm210
    %vm227 = vmand %vm219, %vm211
    %vm228 = vmand %vm220, %vm212
    %vm229 = vmand %vm221, %vm213
    %vm230 = vmand %vm222, %vm214
    %vm231 = vmand %vm223, %vm215
    %v232 = vadd.s32 %v158, 8
    %v233 = vadd.s32 %v165, 8
    %v234 = vadd.s32 %v172, 8
    %v235 = vadd.s32 %v179, 8
    %v236 = vadd.s32 %v186, 8
    %v237 = vadd.s32 %v193, 8
    %v238 = vadd.s32 %v200, 8
    %v239 = vadd.s32 %v207, 8
    %v240 = vsel %vm224, %v232, %v158
    %v241 = vsel %vm225, %v233, %v165
    %v242 = vsel %vm226, %v234, %v172
    %v243 = vsel %vm227, %v235, %v179
    %v244 = vsel %vm228, %v236, %v186
    %v245 = vsel %vm229, %v237, %v193
    %v246 = vsel %vm230, %v238, %v200
    %v247 = vsel %vm231, %v239, %v207
    %v248 = vld [vmem:[%s2] sm:$0x1]
    %v250 = vperm.slane %v248, 0
    %v254 = vunpack.c.l.b16 %v101
    %v255 = vunpack.c.l.b16 %v102
    %v256 = vpack.c.b16 %v255, %v254
    %v258 = vand.u32 %v256, %v67
    %260 = vmatpush.bf16.msra.mxu0 0
    %261 = vmatpush.bf16.msra.mxu0 0
    %262 = vmatpush.bf16.msra.mxu0 0
    %263 = vmatpush.bf16.msra.mxu0 0
    %264 = vmatpush.bf16.msra.mxu0 0
    %265 = vmatpush.bf16.msra.mxu0 0
    %266 = vmatpush.bf16.msra.mxu0 0
    %267 = vmatpush.bf16.msra.mxu0 %v258
    %268 = vmatmul.bf16.gmra.mxu0 %v53
    %v269 = vpop.f32.mrf.mxu0
    %v270 = vadd.f32 %v250, %v269
    %v271 = vpop.f32.mrf.mxu0
    %v272 = vadd.f32 %v250, %v271
    %273 = vmatmul.bf16.gmra.mxu0 %v56
    %v274 = vpop.f32.mrf.mxu0
    %v275 = vadd.f32 %v250, %v274
    %v276 = vpop.f32.mrf.mxu0
    %v277 = vadd.f32 %v250, %v276
    %278 = vmatmul.bf16.gmra.mxu0 %v59
    %v279 = vpop.f32.mrf.mxu0
    %v280 = vadd.f32 %v250, %v279
    %v281 = vpop.f32.mrf.mxu0
    %v282 = vadd.f32 %v250, %v281
    %283 = vmatmul.bf16.gmra.mxu0 %v62
    %v284 = vpop.f32.mrf.mxu0
    %v285 = vadd.f32 %v250, %v284
    %v286 = vpop.f32.mrf.mxu0
    %v287 = vadd.f32 %v250, %v286
    %288 = vdwg.mxu0
    %vm289 = vcmp.eq.s32.totalorder %v240, 0
    %vm290 = vcmp.eq.s32.totalorder %v241, 0
    %vm291 = vcmp.eq.s32.totalorder %v242, 0
    %vm292 = vcmp.eq.s32.totalorder %v243, 0
    %vm293 = vcmp.eq.s32.totalorder %v244, 0
    %vm294 = vcmp.eq.s32.totalorder %v245, 0
    %vm295 = vcmp.eq.s32.totalorder %v246, 0
    %vm296 = vcmp.eq.s32.totalorder %v247, 0
    %v297 = vrot.slane %v81, 7
    %v298 = vrot.slane %v83, 7
    %v299 = vrot.slane %v86, 7
    %v300 = vrot.slane %v88, 7
    %v301 = vrot.slane %v91, 7
    %v302 = vrot.slane %v93, 7
    %v303 = vrot.slane %v96, 7
    %v304 = vrot.slane %v98, 7
    %vm305 = vcmp.lt.s32.totalorder %v144, 1
    %v306 = vsel %vm305, %v303, %v304
    %v307 = vsel %vm305, %v302, %v303
    %v308 = vsel %vm305, %v301, %v302
    %v309 = vsel %vm305, %v300, %v301
    %v310 = vsel %vm305, %v299, %v300
    %v311 = vsel %vm305, %v298, %v299
    %v312 = vsel %vm305, %v297, %v298
    %v313 = vsel %vm305, %v304, %v297
    %v314 = vsel %vm289, 1, 0
    %v315 = vsel %vm290, 1, 0
    %v316 = vsel %vm291, 1, 0
    %v317 = vsel %vm292, 1, 0
    %v318 = vsel %vm293, 1, 0
    %v319 = vsel %vm294, 1, 0
    %v320 = vsel %vm295, 1, 0
    %v321 = vsel %vm296, 1, 0
    %vm322 = vcmp.eq.s32.totalorder %v314, 1
    %vm323 = vcmp.eq.s32.totalorder %v315, 1
    %vm324 = vcmp.eq.s32.totalorder %v316, 1
    %vm325 = vcmp.eq.s32.totalorder %v317, 1
    %vm326 = vcmp.eq.s32.totalorder %v318, 1
    %vm327 = vcmp.eq.s32.totalorder %v319, 1
    %vm328 = vcmp.eq.s32.totalorder %v320, 1
    %vm329 = vcmp.eq.s32.totalorder %v321, 1
    %v330 = vsel %vm322, 0.0, %v313
    %v331 = vsel %vm323, 0.0, %v312
    %v332 = vsel %vm324, 0.0, %v311
    %v333 = vsel %vm325, 0.0, %v310
    %v334 = vsel %vm326, 0.0, %v309
    %v335 = vsel %vm327, 0.0, %v308
    %v336 = vsel %vm328, 0.0, %v307
    %v337 = vsel %vm329, 0.0, %v306
    %v338 = vadd.f32 %v270, %v330
    %v339 = vadd.f32 %v272, %v331
    %v340 = vadd.f32 %v275, %v332
    %v341 = vadd.f32 %v277, %v333
    %v342 = vadd.f32 %v280, %v334
    %v343 = vadd.f32 %v282, %v335
    %v344 = vadd.f32 %v285, %v336
    %v345 = vadd.f32 %v287, %v337
    %vm346 = vcmp.eq.s32.totalorder %v240, 7
    %vm347 = vcmp.eq.s32.totalorder %v241, 7
    %vm348 = vcmp.eq.s32.totalorder %v242, 7
    %vm349 = vcmp.eq.s32.totalorder %v243, 7
    %vm350 = vcmp.eq.s32.totalorder %v244, 7
    %vm351 = vcmp.eq.s32.totalorder %v245, 7
    %vm352 = vcmp.eq.s32.totalorder %v246, 7
    %vm353 = vcmp.eq.s32.totalorder %v247, 7
    %v354 = vrot.slane %v124, 1
    %v355 = vrot.slane %v126, 1
    %v356 = vrot.slane %v129, 1
    %v357 = vrot.slane %v131, 1
    %v358 = vrot.slane %v134, 1
    %v359 = vrot.slane %v136, 1
    %v360 = vrot.slane %v139, 1
    %v361 = vrot.slane %v141, 1
    %vm362 = vcmp.lt.s32.totalorder %v144, 7
    %v363 = vsel %vm362, %v360, %v361
    %v364 = vsel %vm362, %v359, %v360
    %v365 = vsel %vm362, %v358, %v359
    %v366 = vsel %vm362, %v357, %v358
    %v367 = vsel %vm362, %v356, %v357
    %v368 = vsel %vm362, %v355, %v356
    %v369 = vsel %vm362, %v354, %v355
    %v370 = vsel %vm362, %v361, %v354
    %v371 = vsel %vm346, 1, 0
    %v372 = vsel %vm347, 1, 0
    %v373 = vsel %vm348, 1, 0
    %v374 = vsel %vm349, 1, 0
    %v375 = vsel %vm350, 1, 0
    %v376 = vsel %vm351, 1, 0
    %v377 = vsel %vm352, 1, 0
    %v378 = vsel %vm353, 1, 0
    %vm379 = vcmp.eq.s32.totalorder %v371, 1
    %vm380 = vcmp.eq.s32.totalorder %v372, 1
    %vm381 = vcmp.eq.s32.totalorder %v373, 1
    %vm382 = vcmp.eq.s32.totalorder %v374, 1
    %vm383 = vcmp.eq.s32.totalorder %v375, 1
    %vm384 = vcmp.eq.s32.totalorder %v376, 1
    %vm385 = vcmp.eq.s32.totalorder %v377, 1
    %vm386 = vcmp.eq.s32.totalorder %v378, 1
    %v387 = vsel %vm379, 0.0, %v369
    %v388 = vsel %vm380, 0.0, %v368
    %v389 = vsel %vm381, 0.0, %v367
    %v390 = vsel %vm382, 0.0, %v366
    %v391 = vsel %vm383, 0.0, %v365
    %v392 = vsel %vm384, 0.0, %v364
    %v393 = vsel %vm385, 0.0, %v363
    %v394 = vsel %vm386, 0.0, %v370
    %v395 = vadd.f32 %v338, %v387
    %v396 = vadd.f32 %v339, %v388
    %v397 = vadd.f32 %v340, %v389
    %v398 = vadd.f32 %v341, %v390
    %v399 = vadd.f32 %v342, %v391
    %v400 = vadd.f32 %v343, %v392
    %v401 = vadd.f32 %v344, %v393
    %v402 = vadd.f32 %v345, %v394
    %v403 = vpack.c.bf16 %v395, %v395
    %v404 = vpack.c.bf16 %v396, %v396
    %v405 = vpack.c.bf16 %v397, %v397
    %v406 = vpack.c.bf16 %v398, %v398
    %v407 = vpack.c.bf16 %v399, %v399
    %v408 = vpack.c.bf16 %v400, %v400
    %v409 = vpack.c.bf16 %v401, %v401
    %v410 = vpack.c.bf16 %v402, %v402
    %vm411 = vcmask 519168
    %412 = vst.msk [vmem:[#allocation2] sm:$0xf] %vm411, %v403
    %413 = vst.msk [vmem:[#allocation2 + $0x4] sm:$0xf] %vm411, %v404
    %414 = vst.msk [vmem:[#allocation2 + $0x8] sm:$0xf] %vm411, %v405
    %415 = vst.msk [vmem:[#allocation2 + $0xc] sm:$0xf] %vm411, %v406
    %416 = vst.msk [vmem:[#allocation2 + $0x10] sm:$0xf] %vm411, %v407
    %417 = vst.msk [vmem:[#allocation2 + $0x14] sm:$0xf] %vm411, %v408
    %418 = vst.msk [vmem:[#allocation2 + $0x18] sm:$0xf] %vm411, %v409
    %419 = vst.msk [vmem:[#allocation2 + $0x1c] sm:$0xf] %vm411, %v410
    // Predicated region
    $region14: #{tpu_custom_call.1} parent=1 // pred_check
      _
    $region15: #{tpu_custom_call.1} parent=1 // pred_check_branch
      %421 = sbr.rel (0) target = $region17
    $region16: #{tpu_custom_call.1} parent=1 // pred_region
      %423 = vsyncadd [#allocation3], 0
      %s424 = sshll.u32 [#allocation2], 4
      %s425 = int_to_ptr.vmem [resolvable:$true] %s424
      %s426 = sshll.u32 %s3, 4
      %s427 = int_to_ptr.hbm [resolvable:$true] %s426
      %432 = dma.vmem_to_hbm [thread:$0]  %s425, 512, %s427, [#allocation3], 64, 64, 4
    $region17: #{tpu_custom_call.1} parent=1 // pred_fallthru
      _
    // Predicated region
    $region18: #{tpu_custom_call.1} parent=1 // pred_check
      _
    $region19: #{tpu_custom_call.1} parent=1 // pred_check_branch
      %434 = sbr.rel (0) target = $region21
    $region20: #{tpu_custom_call.1} parent=1 // pred_region
      %436 = dma.done [#allocation3], 512
    $region21: #{tpu_custom_call.1} parent=1 // pred_fallthru
      _
    %437 = vsyncpa [#allocation3], 1

</llo_original>
